<compile_context>
chip_gen: v7x
topology: tpu7x:2x2x1
jax: 0.10.0
libtpu: 0.0.40
codegen_flags: <defaults>
</compile_context>

<pallas_src>
import functools
import jax
import jax.numpy as jnp
from jax.experimental import pallas as pl
from jax.experimental.pallas import tpu as pltpu

# ----------------------------- config (small, DistilBERT-shaped) ----------------
VOCAB = 100
MAX_POS = 64
HIDDEN = 32
NUM_HEADS = 4
FFN = 64
N_LAYERS = 2
NUM_LABELS_1 = 3
NUM_LABELS_2 = 5
LN_EPS = 1e-12  # DistilBERT layer-norm eps


# ----------------------------- Pallas kernels ------------------------------------
def _ln_kernel(x_ref, g_ref, b_ref, o_ref, *, eps):
    """LayerNorm over last axis (no residual). x:(M,H) g,b:(1,H)."""
    x = x_ref[...]
    mu = jnp.mean(x, axis=-1, keepdims=True)
    var = jnp.mean((x - mu) ** 2, axis=-1, keepdims=True)
    o_ref[...] = ((x - mu) * jax.lax.rsqrt(var + eps) * g_ref[...] + b_ref[...]
                  ).astype(o_ref.dtype)


def layernorm(x, gamma, beta):
    M, H = x.shape
    return pl.pallas_call(
        functools.partial(_ln_kernel, eps=LN_EPS),
        out_shape=jax.ShapeDtypeStruct((M, H), jnp.float32),
        grid=(1,),
        in_specs=[pl.BlockSpec((M, H), lambda i: (0, 0)),
                  pl.BlockSpec((1, H), lambda i: (0, 0)),
                  pl.BlockSpec((1, H), lambda i: (0, 0))],
        out_specs=pl.BlockSpec((M, H), lambda i: (0, 0)),
    )(x, gamma, beta)


def _linear_kernel(x_ref, w_ref, b_ref, o_ref):
    """y = x @ W + b (used only for the fused classifier heads)."""
    o_ref[...] = (jnp.dot(x_ref[...], w_ref[...], preferred_element_type=jnp.float32)
                  + b_ref[...]).astype(o_ref.dtype)


def linear(x, w, b):
    M, K = x.shape
    N = w.shape[1]
    return pl.pallas_call(
        _linear_kernel,
        out_shape=jax.ShapeDtypeStruct((M, N), jnp.float32),
        grid=(1,),
        in_specs=[pl.BlockSpec((M, K), lambda i: (0, 0)),
                  pl.BlockSpec((K, N), lambda i: (0, 0)),
                  pl.BlockSpec((1, N), lambda i: (0, 0))],
        out_specs=pl.BlockSpec((M, N), lambda i: (0, 0)),
    )(x, w, b)


def _block_kernel(x_ref, m_ref,
                  wqkv_ref, bqkv_ref, wo_ref, bo_ref,
                  ln1g_ref, ln1b_ref, w1_ref, b1_ref, w2_ref, b2_ref,
                  ln2g_ref, ln2b_ref,
                  o_ref, *, num_heads, eps):
    """Entire DistilBERT transformer block for one batch element.

    x:(S,H), mask:(1,S) over key positions, wqkv:(H,3H), wo:(H,H),
    w1:(H,FFN), w2:(FFN,H); all norms/biases (1,·). Everything stays in VMEM.
    """
    S, H = x_ref.shape
    dh = H // num_heads
    scale = 1.0 / (dh ** 0.5)
    neg = jnp.finfo(jnp.float32).min

    x = x_ref[...]                                      # (S, H)
    mask = m_ref[...]                                   # (1, S), {0., 1.}

    # ---- fused QKV projection: one (S,H) @ (H,3H) matmul --------------------
    qkv = jnp.dot(x, wqkv_ref[...], preferred_element_type=jnp.float32) + bqkv_ref[...]

    # ---- multi-head attention, heads statically unrolled (no grid steps) ----
    attn = None
    for h in range(num_heads):
        qh = qkv[:, h * dh:(h + 1) * dh] * scale                       # (S, dh)
        kh = qkv[:, H + h * dh:H + (h + 1) * dh]                       # (S, dh)
        vh = qkv[:, 2 * H + h * dh:2 * H + (h + 1) * dh]               # (S, dh)
        # scores: contract head dims directly — no transposed copy of k.
        s = jax.lax.dot_general(qh, kh, (((1,), (1,)), ((), ())),
                                preferred_element_type=jnp.float32)    # (S, S)
        s = jnp.where(mask == 0.0, neg, s)                             # key mask
        p = jax.nn.softmax(s, axis=-1)
        ctx = jnp.dot(p, vh, preferred_element_type=jnp.float32)       # (S, dh)
        # Fold output projection per head: ctx_h @ W_o[h*dh:(h+1)*dh, :]
        # (identical to concat-heads-then-matmul, avoids in-kernel concatenate).
        contrib = jnp.dot(ctx, wo_ref[pl.ds(h * dh, dh), :],
                          preferred_element_type=jnp.float32)          # (S, H)
        attn = contrib if attn is None else attn + contrib
    attn = attn + bo_ref[...]

    def ln(v, g, b):
        mu = jnp.mean(v, axis=-1, keepdims=True)
        var = jnp.mean((v - mu) ** 2, axis=-1, keepdims=True)
        return (v - mu) * jax.lax.rsqrt(var + eps) * g + b

    x1 = ln(attn + x, ln1g_ref[...], ln1b_ref[...])                    # sa_layer_norm
    hdn = jnp.dot(x1, w1_ref[...], preferred_element_type=jnp.float32) + b1_ref[...]
    hdn = jax.nn.gelu(hdn, approximate=False)                          # HF exact GELU
    ffn = jnp.dot(hdn, w2_ref[...], preferred_element_type=jnp.float32) + b2_ref[...]
    o_ref[...] = ln(ffn + x1, ln2g_ref[...], ln2b_ref[...]).astype(o_ref.dtype)


def transformer_block(x, layer, mask):
    """x: (B, S, H); mask: (B, 1, S). One pallas_call, grid=(B,)."""
    B, S, H = x.shape
    full = lambda shape: pl.BlockSpec(shape, lambda b: (0, 0))
    return pl.pallas_call(
        functools.partial(_block_kernel, num_heads=NUM_HEADS, eps=LN_EPS),
        out_shape=jax.ShapeDtypeStruct((B, S, H), jnp.float32),
        grid=(B,),
        in_specs=[
            pl.BlockSpec((None, S, H), lambda b: (b, 0, 0)),   # x (per batch)
            pl.BlockSpec((None, 1, S), lambda b: (b, 0, 0)),   # mask (per batch)
            full((H, 3 * H)), full((1, 3 * H)),                # wqkv, bqkv
            full((H, H)), full((1, H)),                        # wo, bo
            full((1, H)), full((1, H)),                        # ln1 gamma, beta
            full((H, FFN)), full((1, FFN)),                    # ffn lin1
            full((FFN, H)), full((1, H)),                      # ffn lin2
            full((1, H)), full((1, H)),                        # ln2 gamma, beta
        ],
        out_specs=pl.BlockSpec((None, S, H), lambda b: (b, 0, 0)),
        compiler_params=pltpu.CompilerParams(
            dimension_semantics=("parallel",)),                # v7x: batch across TCs
    )(x, mask,
      layer["wqkv"], layer["bqkv"], layer["wo"], layer["bo"],
      layer["ln1_g"], layer["ln1_b"], layer["w1"], layer["b1"],
      layer["w2"], layer["b2"], layer["ln2_g"], layer["ln2_b"])


# ----------------------------- DistilBERT forward (glue + kernels) ---------------
def distilbert_multi_output(params, input_ids, attention_mask=None):
    """params must be the fused tree produced by fuse_params()."""
    B, S = input_ids.shape
    H = HIDDEN
    if attention_mask is None:
        attention_mask = jnp.ones((B, S), jnp.int32)

    # Embeddings (gather is glue) + embedding LayerNorm (kernel, no zero residual).
    pos_ids = jnp.arange(S)
    emb = (jnp.take(params["word_emb"], input_ids, axis=0)
           + params["pos_emb"][pos_ids][None, :, :])
    x = layernorm(emb.reshape(B * S, H), params["emb_ln_g"], params["emb_ln_b"])
    x = x.reshape(B, S, H)

    mask = attention_mask.astype(jnp.float32).reshape(B, 1, S)
    for layer in params["layers"]:
        x = transformer_block(x, layer, mask)

    pooled = x[:, 0]  # CLS token
    # TODO(synk): nn.Dropout(0.3) treated as identity (eval-mode inference).
    logits = linear(pooled, params["cls_w"], params["cls_b"])   # fused heads, one call
    return {"logits1": logits[:, :NUM_LABELS_1],
            "logits2": logits[:, NUM_LABELS_1:NUM_LABELS_1 + NUM_LABELS_2]}


# ----------------------------- parameter init / one-time fusion ------------------
def init_params(key):
    """Per-matrix params mirroring the PyTorch module (weights pre-transposed to [in,out])."""
    def nrm(k, shape, scale=0.02):
        return (scale * jax.random.normal(k, shape)).astype(jnp.float32)

    keys = jax.random.split(key, 4 + N_LAYERS)
    params = {
        "word_emb": nrm(keys[0], (VOCAB, HIDDEN)),
        "pos_emb": nrm(keys[1], (MAX_POS, HIDDEN)),
        "emb_ln_g": jnp.ones((1, HIDDEN), jnp.float32),
        "emb_ln_b": jnp.zeros((1, HIDDEN), jnp.float32),
        "cls1_w": nrm(keys[2], (HIDDEN, NUM_LABELS_1)),
        "cls1_b": jnp.zeros((1, NUM_LABELS_1), jnp.float32),
        "cls2_w": nrm(keys[3], (HIDDEN, NUM_LABELS_2)),
        "cls2_b": jnp.zeros((1, NUM_LABELS_2), jnp.float32),
        "layers": [],
    }
    for li in range(N_LAYERS):
        lk = jax.random.split(keys[4 + li], 6)
        params["layers"].append({
            "wq": nrm(lk[0], (HIDDEN, HIDDEN)), "bq": jnp.zeros((1, HIDDEN), jnp.float32),
            "wk": nrm(lk[1], (HIDDEN, HIDDEN)), "bk": jnp.zeros((1, HIDDEN), jnp.float32),
            "wv": nrm(lk[2], (HIDDEN, HIDDEN)), "bv": jnp.zeros((1, HIDDEN), jnp.float32),
            "wo": nrm(lk[3], (HIDDEN, HIDDEN)), "bo": jnp.zeros((1, HIDDEN), jnp.float32),
            "ln1_g": jnp.ones((1, HIDDEN), jnp.float32),
            "ln1_b": jnp.zeros((1, HIDDEN), jnp.float32),
            "w1": nrm(lk[4], (HIDDEN, FFN)), "b1": jnp.zeros((1, FFN), jnp.float32),
            "w2": nrm(lk[5], (FFN, HIDDEN)), "b2": jnp.zeros((1, HIDDEN), jnp.float32),
            "ln2_g": jnp.ones((1, HIDDEN), jnp.float32),
            "ln2_b": jnp.zeros((1, HIDDEN), jnp.float32),
        })
    return params


def fuse_params(p):
    """One-time prep: concatenate Q|K|V and the two classifier heads."""
    fused = {
        "word_emb": p["word_emb"], "pos_emb": p["pos_emb"],
        "emb_ln_g": p["emb_ln_g"], "emb_ln_b": p["emb_ln_b"],
        "cls_w": jnp.concatenate([p["cls1_w"], p["cls2_w"]], axis=1),  # (H, L1+L2)
        "cls_b": jnp.concatenate([p["cls1_b"], p["cls2_b"]], axis=1),
        "layers": [],
    }
    for l in p["layers"]:
        fused["layers"].append({
            "wqkv": jnp.concatenate([l["wq"], l["wk"], l["wv"]], axis=1),  # (H, 3H)
            "bqkv": jnp.concatenate([l["bq"], l["bk"], l["bv"]], axis=1),
            "wo": l["wo"], "bo": l["bo"],
            "ln1_g": l["ln1_g"], "ln1_b": l["ln1_b"],
            "w1": l["w1"], "b1": l["b1"], "w2": l["w2"], "b2": l["b2"],
            "ln2_g": l["ln2_g"], "ln2_b": l["ln2_b"],
        })
    return fused


# ----------------------------- main ----------------------------------------------
if __name__ == "__main__":
    key = jax.random.PRNGKey(0)
    pkey, ikey = jax.random.split(key)
    params = fuse_params(init_params(pkey))

    B, S = 2, 8
    input_ids = jax.random.randint(ikey, (B, S), 0, VOCAB, dtype=jnp.int32)
    attention_mask = jnp.ones((B, S), jnp.int32)

    out = distilbert_multi_output(params, input_ids, attention_mask)
    jax.block_until_ready(out)

    assert out["logits1"].shape == (B, NUM_LABELS_1)
    assert out["logits2"].shape == (B, NUM_LABELS_2)
    assert jnp.all(jnp.isfinite(out["logits1"])) and jnp.all(jnp.isfinite(out["logits2"]))
    print("KERNEL_OK")
</pallas_src>

<mosaic_0001>
module attributes {stable_mosaic.version = 11 : i64} {
  func.func @_ln_kernel(%arg0: i32, %arg1: memref<16x32xf32, #tpu.memory_space<vmem>>, %arg2: memref<1x32xf32, #tpu.memory_space<vmem>>, %arg3: memref<1x32xf32, #tpu.memory_space<vmem>>, %arg4: memref<16x32xf32, #tpu.memory_space<vmem>>) attributes {dimension_semantics = [#tpu.dimension_semantics<arbitrary>], iteration_bounds = array<i64: 1>, scalar_prefetch = 0 : i64, scratch_operands = 0 : i64, tpu.core_type = #tpu.core_type<tc>, window_params = [{pipeline_mode = #tpu.pipeline_mode<synchronous>, transform_indices = @transform_0, window_bounds = array<i64: 16, 32>}, {pipeline_mode = #tpu.pipeline_mode<synchronous>, transform_indices = @transform_1, window_bounds = array<i64: 1, 32>}, {pipeline_mode = #tpu.pipeline_mode<synchronous>, transform_indices = @transform_2, window_bounds = array<i64: 1, 32>}, {pipeline_mode = #tpu.pipeline_mode<synchronous>, transform_indices = @transform_3, window_bounds = array<i64: 16, 32>}]} {
    %c0 = arith.constant 0 : index
    %c0_0 = arith.constant 0 : index
    %0 = vector.load %arg1[%c0, %c0_0] : memref<16x32xf32, #tpu.memory_space<vmem>>, vector<16x32xf32>
    %cst = arith.constant dense<0.000000e+00> : vector<16xf32>
    %1 = vector.multi_reduction <add>, %0, %cst [1] : vector<16x32xf32> to vector<16xf32>
    %2 = vector.shape_cast %1 : vector<16xf32> to vector<16x1xf32>
    %cst_1 = arith.constant 3.200000e+01 : f32
    %3 = vector.broadcast %cst_1 : f32 to vector<16x1xf32>
    %4 = arith.divf %2, %3 : vector<16x1xf32>
    %5 = vector.broadcast %4 : vector<16x1xf32> to vector<16x32xf32>
    %6 = arith.subf %0, %5 : vector<16x32xf32>
    %7 = arith.mulf %6, %6 : vector<16x32xf32>
    %cst_2 = arith.constant dense<0.000000e+00> : vector<16xf32>
    %8 = vector.multi_reduction <add>, %7, %cst_2 [1] : vector<16x32xf32> to vector<16xf32>
    %9 = vector.shape_cast %8 : vector<16xf32> to vector<16x1xf32>
    %cst_3 = arith.constant 3.200000e+01 : f32
    %10 = vector.broadcast %cst_3 : f32 to vector<16x1xf32>
    %11 = arith.divf %9, %10 : vector<16x1xf32>
    %12 = vector.broadcast %4 : vector<16x1xf32> to vector<16x32xf32>
    %13 = arith.subf %0, %12 : vector<16x32xf32>
    %cst_4 = arith.constant 9.99999996E-13 : f32
    %14 = vector.broadcast %cst_4 : f32 to vector<16x1xf32>
    %15 = arith.addf %11, %14 : vector<16x1xf32>
    %16 = math.rsqrt %15 : vector<16x1xf32>
    %17 = vector.broadcast %16 : vector<16x1xf32> to vector<16x32xf32>
    %18 = arith.mulf %13, %17 : vector<16x32xf32>
    %c0_5 = arith.constant 0 : index
    %c0_6 = arith.constant 0 : index
    %19 = vector.load %arg2[%c0_5, %c0_6] : memref<1x32xf32, #tpu.memory_space<vmem>>, vector<1x32xf32>
    %20 = vector.broadcast %19 : vector<1x32xf32> to vector<16x32xf32>
    %21 = arith.mulf %18, %20 : vector<16x32xf32>
    %c0_7 = arith.constant 0 : index
    %c0_8 = arith.constant 0 : index
    %22 = vector.load %arg3[%c0_7, %c0_8] : memref<1x32xf32, #tpu.memory_space<vmem>>, vector<1x32xf32>
    %23 = vector.broadcast %22 : vector<1x32xf32> to vector<16x32xf32>
    %24 = arith.addf %21, %23 : vector<16x32xf32>
    %c0_9 = arith.constant 0 : index
    %c0_10 = arith.constant 0 : index
    %25 = vector.load %arg4[%c0_9, %c0_10] : memref<16x32xf32, #tpu.memory_space<vmem>>, vector<16x32xf32>
    tpu.vector_store %arg4[%c0_9, %c0_10], %24 {strides = array<i32>} : memref<16x32xf32, #tpu.memory_space<vmem>>, vector<16x32xf32>,
    return
  }
  func.func @transform_0(%arg0: i32) -> (i32, i32) {
    %c0_i32 = arith.constant 0 : i32
    %c0_i32_0 = arith.constant 0 : i32
    %c0_i32_1 = arith.constant 0 : i32
    return %c0_i32, %c0_i32_0 : i32, i32
  }
  func.func @transform_1(%arg0: i32) -> (i32, i32) {
    %c0_i32 = arith.constant 0 : i32
    %c0_i32_0 = arith.constant 0 : i32
    %c0_i32_1 = arith.constant 0 : i32
    return %c0_i32, %c0_i32_0 : i32, i32
  }
  func.func @transform_2(%arg0: i32) -> (i32, i32) {
    %c0_i32 = arith.constant 0 : i32
    %c0_i32_0 = arith.constant 0 : i32
    %c0_i32_1 = arith.constant 0 : i32
    return %c0_i32, %c0_i32_0 : i32, i32
  }
  func.func @transform_3(%arg0: i32) -> (i32, i32) {
    %c0_i32 = arith.constant 0 : i32
    %c0_i32_0 = arith.constant 0 : i32
    %c0_i32_1 = arith.constant 0 : i32
    return %c0_i32, %c0_i32_0 : i32, i32
  }
}

</mosaic_0001>

<llo_original>
// kernel: tpu_custom_call.1
$region0: #{tpu_custom_call.1}
  #allocation0 [shape = 'u32[]', space=smem, size = 0x4, offset = 0x4, fixed_abs, tag = 'smem constant byte address 0x4 - core index']
  #allocation1 [shape = 'u32[144,128]{1,0:T(1,128)}', space=vmem, size = 0x12000, scoped, tag = 'internal scratch']
  %s0 = inlined_call_operand.hbm [shape: f32[16,32], index: 0, kind: input, shape index: {}]
  %s1 = inlined_call_operand.vmem [shape: f32[1,32], index: 1, kind: input, shape index: {}]
  %s2 = inlined_call_operand.vmem [shape: f32[1,32], index: 2, kind: input, shape index: {}]
  %s3 = inlined_call_operand.hbm [shape: f32[16,32], index: 3, kind: output, shape index: {}]
  %s4 = sld [smem:[#allocation0]]
  $region26: #{tpu_custom_call.1} parent=0
    _
  %s6 = ssub.s32 1, %s4
  %s7 = scalar_select 0, %s6, %s4
  $region1: #{tpu_custom_call.1} parent=0
    #allocation2 [shape = 'u8[8192]{0}', space=vmem, size = 0x2000, scoped, tag = 'input window, operand 0, single buffered']
    #allocation3 [shape = 's32[1]{0}', space=sflag, size = 0x4, scoped, tag = 'scoped memory for tpu_custom_call.1']
    #allocation4 [shape = 's32[1]{0}', space=sflag, size = 0x4, scoped, tag = 'scoped memory for tpu_custom_call.1']
    #allocation5 [shape = 'u8[8192]{0}', space=vmem, size = 0x2000, scoped, tag = 'output window, operand 0, single buffered']
    %8 = vsyncpa [#allocation3], 0
    %9 = vsyncpa [#allocation4], 0
    // Predicated region
    $region2: #{tpu_custom_call.1} parent=1 // pred_check
      _
    $region3: #{tpu_custom_call.1} parent=1 // pred_check_branch
      %11 = sbr.rel (0) target = $region5
    $region4: #{tpu_custom_call.1} parent=1 // pred_region
      %s13 = ssub.s32 256, 256
      %14 = vsyncadd [#allocation3], %s13
      %s15 = sshll.u32 [#allocation2], 4
      %s16 = int_to_ptr.vmem [resolvable:$true] %s15
      %21 = dma.hbm_to_vmem [thread:$0]  %s0, 256, %s16, [#allocation3], 128, 128, 8
    $region5: #{tpu_custom_call.1} parent=1 // pred_fallthru
      _
    // Predicated region
    $region6: #{tpu_custom_call.1} parent=1 // pred_check
      _
    $region7: #{tpu_custom_call.1} parent=1 // pred_check_branch
      %23 = sbr.rel (0) target = $region9
    $region8: #{tpu_custom_call.1} parent=1 // pred_region
      _
    $region9: #{tpu_custom_call.1} parent=1 // pred_fallthru
      _
    // Predicated region
    $region10: #{tpu_custom_call.1} parent=1 // pred_check
      _
    $region11: #{tpu_custom_call.1} parent=1 // pred_check_branch
      %25 = sbr.rel (0) target = $region13
    $region12: #{tpu_custom_call.1} parent=1 // pred_region
      _
    $region13: #{tpu_custom_call.1} parent=1 // pred_fallthru
      _
    // Predicated region
    $region14: #{tpu_custom_call.1} parent=1 // pred_check
      _
    $region15: #{tpu_custom_call.1} parent=1 // pred_check_branch
      %27 = sbr.rel (0) target = $region17
    $region16: #{tpu_custom_call.1} parent=1 // pred_region
      %28 = dma.done [#allocation3], 256
    $region17: #{tpu_custom_call.1} parent=1 // pred_fallthru
      _
    %v29 = vld [vmem:[#allocation2] sm:$0xff]
    %v30 = vld [vmem:[#allocation2 + $0x8] sm:$0xff]
    %vm31 = vcmask 261120
    %v32 = vsel %vm31, %v29, 0.0
    %33 = vadd.xlane.f32.xlu0 %v32
    %v34 = vpop.xlane.xlu0 %33
    %v35 = vsel %vm31, %v30, 0.0
    %36 = vadd.xlane.f32.xlu0 %v35
    %v37 = vpop.xlane.xlu0 %36
    %v38 = vrcp.pop 32.0
    %v39 = vmul.f32 %v34, %v38
    %v40 = vmul.f32 %v37, %v38
    %v41 = vsub.f32 %v29, %v39
    %v42 = vsub.f32 %v30, %v40
    %v43 = vmul.f32 %v41, %v41
    %v44 = vmul.f32 %v42, %v42
    %v45 = vsel %vm31, %v43, 0.0
    %46 = vadd.xlane.f32.xlu0 %v45
    %v47 = vpop.xlane.xlu0 %46
    %v48 = vsel %vm31, %v44, 0.0
    %49 = vadd.xlane.f32.xlu0 %v48
    %v50 = vpop.xlane.xlu0 %49
    %v51 = vmul.f32 %v47, %v38
    %v52 = vmul.f32 %v50, %v38
    %v53 = vadd.f32 %v51, 1e-12
    %v54 = vadd.f32 %v52, 1e-12
    %v55 = vrsqrt.pop %v53
    %v56 = vrsqrt.pop %v54
    %v57 = vmul.f32 %v41, %v55
    %v58 = vmul.f32 %v42, %v56
    %v59 = vld [vmem:[%s1] sm:$0x1]
    %v61 = vlaneseq
    %v62 = vshrl.u32 %v61, 7
    %v63 = vsub.s32 0, %v62
    %v64 = vrot.slane %v59, %v63
    %v66 = vmul.f32 %v57, %v64
    %v67 = vmul.f32 %v58, %v64
    %v68 = vld [vmem:[%s2] sm:$0x1]
    %v70 = vlaneseq
    %v71 = vshrl.u32 %v70, 7
    %v72 = vsub.s32 0, %v71
    %v73 = vrot.slane %v68, %v72
    %v75 = vadd.f32 %v66, %v73
    %v76 = vadd.f32 %v67, %v73
    %77 = vst.msk [vmem:[#allocation5] sm:$0xff] %vm31, %v75
    %78 = vst.msk [vmem:[#allocation5 + $0x8] sm:$0xff] %vm31, %v76
    // Predicated region
    $region18: #{tpu_custom_call.1} parent=1 // pred_check
      _
    $region19: #{tpu_custom_call.1} parent=1 // pred_check_branch
      %80 = sbr.rel (0) target = $region21
    $region20: #{tpu_custom_call.1} parent=1 // pred_region
      %s82 = ssub.s32 256, 256
      %83 = vsyncadd [#allocation4], %s82
      %s84 = sshll.u32 [#allocation5], 4
      %s85 = int_to_ptr.vmem [resolvable:$true] %s84
      %90 = dma.vmem_to_hbm [thread:$0]  %s85, 256, %s3, [#allocation4], 128, 128, 8
    $region21: #{tpu_custom_call.1} parent=1 // pred_fallthru
      _
    // Predicated region
    $region22: #{tpu_custom_call.1} parent=1 // pred_check
      _
    $region23: #{tpu_custom_call.1} parent=1 // pred_check_branch
      %92 = sbr.rel (0) target = $region25
    $region24: #{tpu_custom_call.1} parent=1 // pred_region
      %93 = dma.done [#allocation4], 256
    $region25: #{tpu_custom_call.1} parent=1 // pred_fallthru
      _
    %94 = vsyncpa [#allocation3], 1
    %95 = vsyncpa [#allocation4], 1

</llo_original>
